<compile_context>
chip_gen: v7x
topology: tpu7x:2x2x1
jax: 0.10.0
libtpu: 0.0.40
codegen_flags: <defaults>
</compile_context>

<pallas_src>
import functools

import jax
import jax.numpy as jnp
from jax.experimental import pallas as pl
from jax.experimental.pallas import tpu as pltpu


def _round_up(x, m):
    return ((x + m - 1) // m) * m


def fm_kernel(x_ref, vaug_ref, coef_ref, w0_ref, out_ref):
    # x_ref   : (TB, D)        batch tile of the densified input (f32 or bf16)
    # vaug_ref: (D, Lp)        [v | w | rowsum(v*v) | 0...]      (f32 or bf16)
    # coef_ref: (2, Lp) f32    row 0 = linear coeffs a, row 1 = quadratic coeffs b
    # w0_ref  : (1,)   f32     bias, in SMEM
    # out_ref : (1, 1, TB)     lane-dense output tile
    y = jnp.dot(x_ref[...], vaug_ref[...],
                preferred_element_type=jnp.float32)          # (TB, Lp) f32
    coef = coef_ref[...]                                     # (2, Lp)  f32
    a = coef[0:1, :]                                         # (1, Lp)
    b = coef[1:2, :]                                         # (1, Lp)
    # sum_l [ a_l * y_l + b_l * y_l^2 ]
    #   cols 0..L-1 : 0.5 * xv_l^2
    #   col  L      : x @ w
    #   col  L+1    : -0.5 * x @ rowsum(v*v)
    contrib = y * (a + y * b)                                # (TB, Lp)
    result = w0_ref[0] + jnp.sum(contrib, axis=1)            # (TB,)
    out_ref[0, 0, :] = result.astype(out_ref.dtype)


def factorization_machine(x, w0, w, v, *, batch_tile=256,
                          matmul_dtype=jnp.float32, vmem_limit_bytes=None):
    """x: (B, D) dense float; w0: (1,); w: (D,); v: (D, L). Returns (B,) f32."""
    B, D = x.shape
    L = v.shape[1]
    Lp = max(128, _round_up(L + 2, 128))  # pad matmul N-dim toward MXU width

    v_f32 = v.astype(jnp.float32)
    w_f32 = w.astype(jnp.float32)
    vsq = jnp.sum(v_f32 * v_f32, axis=1)                     # (D,) rowsum(v*v)

    # Augmented weight matrix: one matmul replaces x@w, x@v, x@(v*v).
    vaug = jnp.zeros((D, Lp), jnp.float32)
    vaug = vaug.at[:, :L].set(v_f32)
    vaug = vaug.at[:, L].set(w_f32)
    vaug = vaug.at[:, L + 1].set(vsq)

    col = jnp.arange(Lp)
    a = jnp.where(col == L, 1.0, jnp.where(col == L + 1, -0.5, 0.0))
    b = jnp.where(col < L, 0.5, 0.0)
    coef = jnp.stack([a, b], axis=0).astype(jnp.float32)     # (2, Lp)

    # Batch tiling (pad ragged batches with zero rows).
    bt = _round_up(min(batch_tile, _round_up(B, 8)), 8)
    B_pad = _round_up(B, bt)
    x_f32 = x.astype(jnp.float32)
    if B_pad != B:
        x_f32 = jnp.pad(x_f32, ((0, B_pad - B), (0, 0)))
    num_tiles = B_pad // bt

    x_mm = x_f32.astype(matmul_dtype)
    vaug_mm = vaug.astype(matmul_dtype)
    w0_s = w0.reshape(1).astype(jnp.float32)

    compiler_kwargs = dict(dimension_semantics=("parallel",))
    if vmem_limit_bytes is not None:
        compiler_kwargs["vmem_limit_bytes"] = vmem_limit_bytes

    out = pl.pallas_call(
        fm_kernel,
        out_shape=jax.ShapeDtypeStruct((num_tiles, 1, bt), jnp.float32),
        grid_spec=pltpu.PrefetchScalarGridSpec(
            num_scalar_prefetch=0,
            grid=(num_tiles,),
            in_specs=[
                pl.BlockSpec((bt, D), lambda i: (i, 0)),       # x batch tile
                pl.BlockSpec((D, Lp), lambda i: (0, 0)),       # V_aug (resident)
                pl.BlockSpec((2, Lp), lambda i: (0, 0)),       # coefficients
                pl.BlockSpec(memory_space=pltpu.MemorySpace.SMEM),  # w0 scalar
            ],
            out_specs=pl.BlockSpec((1, 1, bt), lambda i: (i, 0, 0)),
        ),
        compiler_params=pltpu.CompilerParams(**compiler_kwargs),
    )(x_mm, vaug_mm, coef, w0_s)
    return out.reshape(B_pad)[:B]


def fm_reference(x, w0, w, v):
    linear = w0[0] + x @ w
    xv = x @ v
    xv2 = x @ (v * v)
    interaction = 0.5 * (jnp.sum(xv * xv, axis=1) - jnp.sum(xv2, axis=1))
    return linear + interaction


if __name__ == "__main__":
    key = jax.random.PRNGKey(0)
    B, D, L = 16, 32, 16  # batch, dim_input, dim_latent

    k_x, k_w, k_v, k_mask = jax.random.split(key, 4)
    # Emulate a sparse input: dense matrix with ~75% zeros.
    x_dense = jax.random.normal(k_x, (B, D), dtype=jnp.float32)
    mask = (jax.random.uniform(k_mask, (B, D)) < 0.25).astype(jnp.float32)
    x = x_dense * mask

    # Parameter shapes match the module's __init__:
    # w0 = zeros(1), w = randn(dim_input), v = randn(dim_input, dim_latent)
    w0 = jnp.zeros((1,), dtype=jnp.float32)
    w = jax.random.normal(k_w, (D,), dtype=jnp.float32)
    v = jax.random.normal(k_v, (D, L), dtype=jnp.float32)

    ref = fm_reference(x, w0, w, v)

    # f32 matmul path: tight check against the reference.
    out = factorization_machine(x, w0, w, v, matmul_dtype=jnp.float32)
    out = jax.block_until_ready(out)
    assert out.shape == (B,)
    assert jnp.allclose(out, ref, atol=1e-3, rtol=1e-4), (out, ref)

    # bf16 matmul inputs (f32 accumulation): loose check, per the perf review.
    out_bf16 = factorization_machine(x, w0, w, v, matmul_dtype=jnp.bfloat16)
    out_bf16 = jax.block_until_ready(out_bf16)
    scale = jnp.max(jnp.abs(ref)) + 1e-6
    assert jnp.max(jnp.abs(out_bf16 - ref)) / scale < 0.1, (out_bf16, ref)

    print("KERNEL_OK")
</pallas_src>

<mosaic_0001>
module attributes {stable_mosaic.version = 11 : i64} {
  func.func @fm_kernel(%arg0: i32, %arg1: memref<16x32xf32, #tpu.memory_space<vmem>>, %arg2: memref<32x128xf32, #tpu.memory_space<vmem>>, %arg3: memref<2x128xf32, #tpu.memory_space<vmem>>, %arg4: memref<1xf32, #tpu.memory_space<smem>>, %arg5: memref<1x1x16xf32, #tpu.memory_space<vmem>>) attributes {dimension_semantics = [#tpu.dimension_semantics<parallel>], iteration_bounds = array<i64: 1>, scalar_prefetch = 0 : i64, scratch_operands = 0 : i64, tpu.core_type = #tpu.core_type<tc>, window_params = [{transform_indices = @transform_0, window_bounds = array<i64: 16, 32>}, {pipeline_mode = #tpu.pipeline_mode<synchronous>, transform_indices = @transform_1, window_bounds = array<i64: 32, 128>}, {pipeline_mode = #tpu.pipeline_mode<synchronous>, transform_indices = @transform_2, window_bounds = array<i64: 2, 128>}, {transform_indices = @transform_3, window_bounds = array<i64: 1>}, {transform_indices = @transform_4, window_bounds = array<i64: 1, 1, 16>}]} {
    %c0 = arith.constant 0 : index
    %c0_0 = arith.constant 0 : index
    %0 = vector.load %arg1[%c0, %c0_0] : memref<16x32xf32, #tpu.memory_space<vmem>>, vector<16x32xf32>
    %c0_1 = arith.constant 0 : index
    %c0_2 = arith.constant 0 : index
    %1 = vector.load %arg2[%c0_1, %c0_2] : memref<32x128xf32, #tpu.memory_space<vmem>>, vector<32x128xf32>
    %cst = arith.constant dense<0.000000e+00> : vector<16x128xf32>
    %2 = tpu.matmul %0, %1, %cst {dimension_numbers = #tpu.dot_dimension_numbers<[1], [0], [0], [1], [0, 0, 1, 1], [], []>} : vector<16x32xf32>, vector<32x128xf32>, vector<16x128xf32> -> vector<16x128xf32>
    %c0_3 = arith.constant 0 : index
    %c0_4 = arith.constant 0 : index
    %3 = vector.load %arg3[%c0_3, %c0_4] : memref<2x128xf32, #tpu.memory_space<vmem>>, vector<2x128xf32>
    %4 = vector.extract_strided_slice %3 {offsets = [0, 0], sizes = [1, 128], strides = [1, 1]} : vector<2x128xf32> to vector<1x128xf32>
    %5 = vector.extract_strided_slice %3 {offsets = [1, 0], sizes = [1, 128], strides = [1, 1]} : vector<2x128xf32> to vector<1x128xf32>
    %6 = vector.broadcast %5 : vector<1x128xf32> to vector<16x128xf32>
    %7 = arith.mulf %2, %6 : vector<16x128xf32>
    %8 = vector.broadcast %4 : vector<1x128xf32> to vector<16x128xf32>
    %9 = arith.addf %8, %7 : vector<16x128xf32>
    %10 = arith.mulf %2, %9 : vector<16x128xf32>
    %c0_5 = arith.constant 0 : index
    %11 = memref.load %arg4[%c0_5] : memref<1xf32, #tpu.memory_space<smem>>
    %cst_6 = arith.constant dense<0.000000e+00> : vector<16xf32>
    %12 = vector.multi_reduction <add>, %10, %cst_6 [1] : vector<16x128xf32> to vector<16xf32>
    %13 = vector.broadcast %11 : f32 to vector<16xf32>
    %14 = arith.addf %13, %12 : vector<16xf32>
    %c0_7 = arith.constant 0 : index
    %c0_8 = arith.constant 0 : index
    %c0_9 = arith.constant 0 : index
    %15 = vector.load %arg5[%c0_7, %c0_8, %c0_9] : memref<1x1x16xf32, #tpu.memory_space<vmem>>, vector<1x1x16xf32>
    %16 = vector.shape_cast %15 : vector<1x1x16xf32> to vector<16xf32>
    %17 = vector.shape_cast %14 : vector<16xf32> to vector<1x1x16xf32>
    tpu.vector_store %arg5[%c0_7, %c0_8, %c0_9], %17 {strides = array<i32>} : memref<1x1x16xf32, #tpu.memory_space<vmem>>, vector<1x1x16xf32>,
    return
  }
  func.func @transform_0(%arg0: i32) -> (i32, i32) {
    %c0_i32 = arith.constant 0 : i32
    %c0_i32_0 = arith.constant 0 : i32
    return %arg0, %c0_i32 : i32, i32
  }
  func.func @transform_1(%arg0: i32) -> (i32, i32) {
    %c0_i32 = arith.constant 0 : i32
    %c0_i32_0 = arith.constant 0 : i32
    %c0_i32_1 = arith.constant 0 : i32
    return %c0_i32, %c0_i32_0 : i32, i32
  }
  func.func @transform_2(%arg0: i32) -> (i32, i32) {
    %c0_i32 = arith.constant 0 : i32
    %c0_i32_0 = arith.constant 0 : i32
    %c0_i32_1 = arith.constant 0 : i32
    return %c0_i32, %c0_i32_0 : i32, i32
  }
  func.func @transform_3(%arg0: i32) -> i32 {
    %c0_i32 = arith.constant 0 : i32
    %c0_i32_0 = arith.constant 0 : i32
    return %c0_i32 : i32
  }
  func.func @transform_4(%arg0: i32) -> (i32, i32, i32) {
    %c0_i32 = arith.constant 0 : i32
    %c0_i32_0 = arith.constant 0 : i32
    %c0_i32_1 = arith.constant 0 : i32
    return %arg0, %c0_i32, %c0_i32_0 : i32, i32, i32
  }
}

</mosaic_0001>

<llo_original>
// kernel: tpu_custom_call.1
$region0: #{tpu_custom_call.1}
  #allocation0 [shape = 'u32[]', space=smem, size = 0x4, offset = 0x4, fixed_abs, tag = 'smem constant byte address 0x4 - core index']
  #allocation1 [shape = 'u32[144,128]{1,0:T(1,128)}', space=vmem, size = 0x12000, scoped, tag = 'internal scratch']
  #allocation2 [shape = 'f32[1]{0:T(128)S(6)}', space=smem, size = 0x200, scoped, tag = 'scoped memory for tpu_custom_call.1']
  %s0 = inlined_call_operand.hbm [shape: f32[16,32], index: 0, kind: input, shape index: {}]
  %s1 = inlined_call_operand.hbm [shape: f32[32,128], index: 1, kind: input, shape index: {}]
  %s2 = inlined_call_operand.vmem [shape: f32[2,128], index: 2, kind: input, shape index: {}]
  %s3 = inlined_call_operand.<no memory space> [shape: f32[1], index: 3, kind: input, shape index: {}]
  %s4 = inlined_call_operand.hbm [shape: f32[1,1,16], index: 4, kind: output, shape index: {}]
  %s5 = sld [smem:[#allocation0]]
  $region34: #{tpu_custom_call.1} parent=0
    _
  %s7 = ssub.s32 1, %s5
  %s8 = scalar_select 0, %s7, %s5
  %9 = sst [smem:[#allocation2]] %s3
  $region1: #{tpu_custom_call.1} parent=0
    #allocation3 [shape = 'u8[8192]{0}', space=vmem, size = 0x2000, scoped, tag = 'input window, operand 0, single buffered']
    #allocation4 [shape = 's32[1]{0}', space=sflag, size = 0x4, scoped, tag = 'scoped memory for tpu_custom_call.1']
    #allocation5 [shape = 's32[1]{0}', space=sflag, size = 0x4, scoped, tag = 'scoped memory for tpu_custom_call.1']
    #allocation6 [shape = 'u8[16384]{0}', space=vmem, size = 0x4000, scoped, tag = 'input window, operand 1, single buffered']
    #allocation7 [shape = 's32[1]{0}', space=sflag, size = 0x4, scoped, tag = 'scoped memory for tpu_custom_call.1']
    #allocation8 [shape = 'u8[512]{0}', space=vmem, size = 0x400, scoped, tag = 'output window, operand 0, single buffered']
    %10 = vsyncpa [#allocation4], 0
    %11 = vsyncpa [#allocation7], 0
    %12 = vsyncpa [#allocation5], 0
    // Predicated region
    $region2: #{tpu_custom_call.1} parent=1 // pred_check
      _
    $region3: #{tpu_custom_call.1} parent=1 // pred_check_branch
      %14 = sbr.rel (0) target = $region5
    $region4: #{tpu_custom_call.1} parent=1 // pred_region
      %s16 = ssub.s32 256, 256
      %17 = vsyncadd [#allocation4], %s16
      %s18 = sshll.u32 [#allocation3], 4
      %s19 = int_to_ptr.vmem [resolvable:$true] %s18
      %24 = dma.hbm_to_vmem [thread:$0]  %s0, 256, %s19, [#allocation4], 128, 128, 8
    $region5: #{tpu_custom_call.1} parent=1 // pred_fallthru
      _
    // Predicated region
    $region6: #{tpu_custom_call.1} parent=1 // pred_check
      _
    $region7: #{tpu_custom_call.1} parent=1 // pred_check_branch
      %26 = sbr.rel (0) target = $region9
    $region8: #{tpu_custom_call.1} parent=1 // pred_region
      %s28 = ssub.s32 512, 512
      %29 = vsyncadd [#allocation7], %s28
      %s30 = sshll.u32 [#allocation6], 4
      %s31 = int_to_ptr.vmem [resolvable:$true] %s30
      %36 = dma.hbm_to_vmem [thread:$0]  %s1, 512, %s31, [#allocation7], 128, 128, 8
    $region9: #{tpu_custom_call.1} parent=1 // pred_fallthru
      _
    // Predicated region
    $region10: #{tpu_custom_call.1} parent=1 // pred_check
      _
    $region11: #{tpu_custom_call.1} parent=1 // pred_check_branch
      %38 = sbr.rel (0) target = $region13
    $region12: #{tpu_custom_call.1} parent=1 // pred_region
      _
    $region13: #{tpu_custom_call.1} parent=1 // pred_fallthru
      _
    // Predicated region
    $region14: #{tpu_custom_call.1} parent=1 // pred_check
      _
    $region15: #{tpu_custom_call.1} parent=1 // pred_check_branch
      %40 = sbr.rel (0) target = $region17
    $region16: #{tpu_custom_call.1} parent=1 // pred_region
      _
    $region17: #{tpu_custom_call.1} parent=1 // pred_fallthru
      _
    // Predicated region
    $region18: #{tpu_custom_call.1} parent=1 // pred_check
      _
    $region19: #{tpu_custom_call.1} parent=1 // pred_check_branch
      %42 = sbr.rel (0) target = $region21
    $region20: #{tpu_custom_call.1} parent=1 // pred_region
      %43 = dma.done [#allocation4], 256
    $region21: #{tpu_custom_call.1} parent=1 // pred_fallthru
      _
    // Predicated region
    $region22: #{tpu_custom_call.1} parent=1 // pred_check
      _
    $region23: #{tpu_custom_call.1} parent=1 // pred_check_branch
      %45 = sbr.rel (0) target = $region25
    $region24: #{tpu_custom_call.1} parent=1 // pred_region
      %46 = dma.done [#allocation7], 512
    $region25: #{tpu_custom_call.1} parent=1 // pred_fallthru
      _
    %v47 = vld [vmem:[#allocation3] sm:$0xff]
    %v48 = vld [vmem:[#allocation3 + $0x8] sm:$0xff]
    %v49 = vld [vmem:[#allocation6] sm:$0xff]
    %v50 = vld [vmem:[#allocation6 + $0x8] sm:$0xff]
    %v51 = vld [vmem:[#allocation6 + $0x10] sm:$0xff]
    %v52 = vld [vmem:[#allocation6 + $0x18] sm:$0xff]
    %vm53 = vcmask 261120
    %v55 = vsel %vm53, %v47, 0
    %v58 = vsel %vm53, %v48, 0
    %60 = vmatprep.subr.mxu0 0.0
    %61 = vmatpush1.msra.mxu0 %v49
    %62 = vmatprep.subr.mxu0 0.0
    %63 = vmatpush1.msra.mxu0 %v50
    %64 = vmatprep.subr.mxu0 0.0
    %65 = vmatpush1.msra.mxu0 %v51
    %66 = vmatprep.subr.mxu0 0.0
    %67 = vmatpush1.msra.mxu0 %v52
    %68 = vmatprep.subr.mxu0 0.0
    %69 = vmatpush1.msra.mxu0 0.0
    %70 = vmatprep.subr.mxu0 0.0
    %71 = vmatpush1.msra.mxu0 0.0
    %72 = vmatprep.subr.mxu0 0.0
    %73 = vmatpush1.msra.mxu0 0.0
    %74 = vmatprep.subr.mxu0 0.0
    %75 = vmatpush1.msra.mxu0 0.0
    %76 = vmatprep.subr.mxu0 0.0
    %77 = vmatpush1.msra.mxu0 0.0
    %78 = vmatprep.subr.mxu0 0.0
    %79 = vmatpush1.msra.mxu0 0.0
    %80 = vmatprep.subr.mxu0 0.0
    %81 = vmatpush1.msra.mxu0 0.0
    %82 = vmatprep.subr.mxu0 0.0
    %83 = vmatpush1.msra.mxu0 0.0
    %84 = vmatprep.subr.mxu0 0.0
    %85 = vmatpush1.msra.mxu0 0.0
    %86 = vmatprep.subr.mxu0 0.0
    %87 = vmatpush1.msra.mxu0 0.0
    %88 = vmatprep.subr.mxu0 0.0
    %89 = vmatpush1.msra.mxu0 0.0
    %90 = vmatprep.subr.mxu0 0.0
    %91 = vmatpush1.msra.mxu0 0.0
    %92 = vmatprep.subr.mxu0 0.0
    %93 = vmatpush1.msra.mxu0 0.0
    %94 = vmatprep.subr.mxu0 0.0
    %95 = vmatpush1.msra.mxu0 0.0
    %96 = vmatprep.subr.mxu0 0.0
    %97 = vmatpush1.msra.mxu0 0.0
    %98 = vmatprep.subr.mxu0 0.0
    %99 = vmatpush1.msra.mxu0 0.0
    %100 = vmatprep.subr.mxu0 0.0
    %101 = vmatpush1.msra.mxu0 0.0
    %102 = vmatprep.subr.mxu0 0.0
    %103 = vmatpush1.msra.mxu0 0.0
    %104 = vmatprep.subr.mxu0 0.0
    %105 = vmatpush1.msra.mxu0 0.0
    %106 = vmatprep.subr.mxu0 0.0
    %107 = vmatpush1.msra.mxu0 0.0
    %108 = vmatprep.subr.mxu0 0.0
    %109 = vmatpush1.msra.mxu0 0.0
    %110 = vmatprep.subr.mxu0 0.0
    %111 = vmatpush1.msra.mxu0 0.0
    %112 = vmatprep.subr.mxu0 0.0
    %113 = vmatpush1.msra.mxu0 0.0
    %114 = vmatprep.subr.mxu0 0.0
    %115 = vmatpush1.msra.mxu0 0.0
    %116 = vmatprep.subr.mxu0 0.0
    %117 = vmatpush1.msra.mxu0 0.0
    %118 = vmatprep.subr.mxu0 0.0
    %119 = vmatpush1.msra.mxu0 0.0
    %120 = vmatprep.subr.mxu0 0.0
    %121 = vmatpush1.msra.mxu0 0.0
    %122 = vmatprep.subr.mxu0 0.0
    %123 = vmatpush1.msra.mxu0 0.0
    %124 = vmatprep.mubr.f32.mxu0 0.0
    %125 = vmatmul.mubr.f32.gmra.mrb[0].mxu0 %v55
    %v126 = vpop.f32.mrb[0].mxu0
    %v127 = vadd.f32 0.0, %v126
    %v128 = vpop.f32.mrb[0].mxu0
    %129 = vmatprep.mubr.f32.mxu0 0.0
    %130 = vmatmul.mubr.f32.gmra.mrb[0].mxu0 %v58
    %v131 = vpop.f32.mrb[0].mxu0
    %v132 = vadd.f32 0.0, %v131
    %v133 = vpop.f32.mrb[0].mxu0
    %134 = vdwg.mxu0
    %v135 = vld [vmem:[%s2] sm:$0x3]
    %v136 = vlaneseq
    %v137 = vshrl.u32 %v136, 7
    %v138 = vsub.s32 1, %v137
    %v139 = vrot.slane %v135, %v138
    %v140 = vmul.f32 %v127, %v139
    %v141 = vmul.f32 %v132, %v139
    %v142 = vlaneseq
    %v143 = vshrl.u32 %v142, 7
    %v144 = vsub.s32 0, %v143
    %v145 = vrot.slane %v135, %v144
    %v146 = vadd.f32 %v145, %v140
    %v147 = vadd.f32 %v145, %v141
    %v148 = vmul.f32 %v127, %v146
    %v149 = vmul.f32 %v132, %v147
    %s150 = sld [smem:[#allocation2]]
    %151 = vadd.xlane.f32.xlu0 %v148
    %v152 = vpop.xlane.xlu0 %151
    %153 = vadd.xlane.f32.xlu0 %v149
    %v154 = vpop.xlane.xlu0 %153
    %v155 = vstv %s150
    %v156 = vadd.f32 %v155, %v152
    %v157 = vadd.f32 %v155, %v154
    %v160 = vlaneseq
    %v161 = vand.u32 %v160, 127
    %v162 = vlaneseq
    %v163 = vshrl.u32 %v162, 7
    %v164 = vsub.s32 %v161, %v163
    %v165 = vrot.slane %v156, %v164
    %v166 = vadd.s32 %v161, 4294967288
    %v167 = vlaneseq
    %v168 = vshrl.u32 %v167, 7
    %v169 = vsub.s32 %v166, %v168
    %v170 = vrot.slane %v157, %v169
    %vm171 = vcmask 130112
    %v172 = vsel %vm171, %v170, %v165
    %vm174 = vcmask 122880
    %175 = vst.msk [vmem:[#allocation8] sm:$0x1] %vm174, %v172
    // Predicated region
    $region26: #{tpu_custom_call.1} parent=1 // pred_check
      _
    $region27: #{tpu_custom_call.1} parent=1 // pred_check_branch
      %177 = sbr.rel (0) target = $region29
    $region28: #{tpu_custom_call.1} parent=1 // pred_region
      %s179 = ssub.s32 16, 16
      %180 = vsyncadd [#allocation5], %s179
      %s182 = sshll.u32 [#allocation8], 4
      %s183 = int_to_ptr.vmem [resolvable:$true] %s182
      %185 = dma.vmem_to_hbm [thread:$0]  %s183, 16, %s4, [#allocation5]
    $region29: #{tpu_custom_call.1} parent=1 // pred_fallthru
      _
    // Predicated region
    $region30: #{tpu_custom_call.1} parent=1 // pred_check
      _
    $region31: #{tpu_custom_call.1} parent=1 // pred_check_branch
      %187 = sbr.rel (0) target = $region33
    $region32: #{tpu_custom_call.1} parent=1 // pred_region
      %188 = dma.done [#allocation5], 16
    $region33: #{tpu_custom_call.1} parent=1 // pred_fallthru
      _
    %189 = vsyncpa [#allocation4], 1
    %190 = vsyncpa [#allocation7], 1
    %191 = vsyncpa [#allocation5], 1

</llo_original>
